<compile_context>
chip_gen: v7x
topology: tpu7x:2x2x1
jax: 0.10.0
libtpu: 0.0.40
codegen_flags: <defaults>
</compile_context>

<pallas_src>
import jax
import jax.numpy as jnp
from jax.experimental import pallas as pl
from jax.experimental.pallas import tpu as pltpu


def _round_up(x, m):
    return ((x + m - 1) // m) * m


_TB_MAX = 1024  # rows per grid step; few-hundred-KiB footprint, far under VMEM on all gens


def _choose_batch_tile(batch):
    """Pick (tile_rows, num_grid_steps) for the batch dimension."""
    if batch <= 8:
        # Single step; block second-to-last dim equals the full array dim, so
        # the (8, 128) divisibility rule is satisfied even for tiny batches.
        return batch, 1
    # >= 2 steps so both v7x TensorCores get work; tiles capped at _TB_MAX so
    # single-TC v5e/v6e still amortize per-step overhead for large batches.
    tb = min(_TB_MAX, _round_up(pl.cdiv(batch, 2), 8))
    return tb, pl.cdiv(batch, tb)


def _qnetwork_kernel(x_ref, w1_ref, b1_ref, w2_ref, b2_ref, w3_ref, b3_ref, o_ref):
    # Cast operands to bf16 in-kernel (cheap VPU work on tiny resident tiles);
    # MXU accumulates in f32; bias-add / ReLU epilogue stays f32.
    x = x_ref[...].astype(jnp.bfloat16)
    w1 = w1_ref[...].astype(jnp.bfloat16)
    w2 = w2_ref[...].astype(jnp.bfloat16)
    w3 = w3_ref[...].astype(jnp.bfloat16)

    h1 = jnp.dot(x, w1, preferred_element_type=jnp.float32) + b1_ref[...]
    h1 = jnp.maximum(h1, 0.0).astype(jnp.bfloat16)

    h2 = jnp.dot(h1, w2, preferred_element_type=jnp.float32) + b2_ref[...]
    h2 = jnp.maximum(h2, 0.0).astype(jnp.bfloat16)

    out = jnp.dot(h2, w3, preferred_element_type=jnp.float32) + b3_ref[...]
    o_ref[...] = out.astype(o_ref.dtype)


@jax.jit
def qnetwork_forward(x, w1, b1, w2, b2, w3, b3):
    """x: [batch, state]; weights stored [in, out] so the kernel does x @ W + b."""
    batch, state_size = x.shape
    fc1 = w1.shape[1]
    fc2 = w2.shape[1]
    action = w3.shape[1]

    # Biases as (1, n) rows; reshape is metadata-only (free) if already 2-D.
    b1 = b1.reshape(1, fc1)
    b2 = b2.reshape(1, fc2)
    b3 = b3.reshape(1, action)

    tb, grid_b = _choose_batch_tile(batch)

    def resident(arr):
        # Constant block index across the grid -> fetched into VMEM once.
        return pl.BlockSpec(arr.shape, lambda i: (0, 0))

    flops = 2 * batch * (state_size * fc1 + fc1 * fc2 + fc2 * action)
    bytes_accessed = (
        x.size * x.dtype.itemsize
        + sum(a.size * a.dtype.itemsize for a in (w1, b1, w2, b2, w3, b3))
        + batch * action * 4
    )

    out = pl.pallas_call(
        _qnetwork_kernel,
        out_shape=jax.ShapeDtypeStruct((batch, action), jnp.float32),
        grid=(grid_b,),
        in_specs=[
            pl.BlockSpec((tb, state_size), lambda i: (i, 0)),   # x: tiled over batch
            resident(w1), resident(b1),                          # params resident in VMEM
            resident(w2), resident(b2),
            resident(w3), resident(b3),
        ],
        # Narrow (action-wide) f32 output block: masked vst, but ~32x less HBM
        # writeback than a 128-lane padded slab, and no post-slice needed.
        out_specs=pl.BlockSpec((tb, action), lambda i: (i, 0)),
        compiler_params=pltpu.CompilerParams(
            dimension_semantics=("parallel",),          # split batch tiles across v7x's 2 TCs
            vmem_limit_bytes=16 * 1024 * 1024,          # explicit; safe on v5e/v6e/v7x
        ),
        cost_estimate=pl.CostEstimate(
            flops=flops, transcendentals=0, bytes_accessed=bytes_accessed),
    )(x, w1, b1, w2, b2, w3, b3)

    return out


def init_params(key, state_size, action_size, fc1_unit=64, fc2_unit=64):
    """Deterministic init mimicking nn.Linear's U(-1/sqrt(fan_in), 1/sqrt(fan_in))."""
    ks = jax.random.split(key, 6)

    def linear(kw, kb, fan_in, fan_out):
        bound = 1.0 / jnp.sqrt(jnp.float32(fan_in))
        # stored as [in, out] so the kernel does x @ W
        w = jax.random.uniform(kw, (fan_in, fan_out), jnp.float32, -bound, bound)
        b = jax.random.uniform(kb, (1, fan_out), jnp.float32, -bound, bound)
        return w, b

    w1, b1 = linear(ks[0], ks[1], state_size, fc1_unit)
    w2, b2 = linear(ks[2], ks[3], fc1_unit, fc2_unit)
    w3, b3 = linear(ks[4], ks[5], fc2_unit, action_size)
    return w1, b1, w2, b2, w3, b3


def _reference_bf16(x, params):
    """Plain-JAX reference with the same bf16-in / f32-accumulate math."""
    w1, b1, w2, b2, w3, b3 = params
    h = jnp.dot(x.astype(jnp.bfloat16), w1.astype(jnp.bfloat16),
                preferred_element_type=jnp.float32) + b1.reshape(1, -1)
    h = jnp.maximum(h, 0.0).astype(jnp.bfloat16)
    h = jnp.dot(h, w2.astype(jnp.bfloat16),
                preferred_element_type=jnp.float32) + b2.reshape(1, -1)
    h = jnp.maximum(h, 0.0).astype(jnp.bfloat16)
    return jnp.dot(h, w3.astype(jnp.bfloat16),
                   preferred_element_type=jnp.float32) + b3.reshape(1, -1)


if __name__ == "__main__":
    key = jax.random.PRNGKey(0)
    k_x, k_x2, k_p = jax.random.split(key, 3)

    state_size = 8
    action_size = 4
    fc1_unit = 64
    fc2_unit = 64

    params = init_params(k_p, state_size, action_size, fc1_unit, fc2_unit)
    w1, b1, w2, b2, w3, b3 = params

    # --- tiny batch: single grid step, full-array blocks ---
    batch = 2
    x = jax.random.normal(k_x, (batch, state_size), jnp.float32)
    out = qnetwork_forward(x, *params)
    jax.block_until_ready(out)
    assert out.shape == (batch, action_size)
    assert jnp.allclose(out, _reference_bf16(x, params), atol=1e-2, rtol=1e-2)

    # Looser sanity check against a full-f32 reference (bf16 quantization only).
    ref_f32 = jnp.maximum(x @ w1 + b1, 0.0)
    ref_f32 = jnp.maximum(ref_f32 @ w2 + b2, 0.0)
    ref_f32 = ref_f32 @ w3 + b3
    assert jnp.allclose(out, ref_f32, atol=5e-2, rtol=5e-2)

    # --- larger batch: 2 grid steps with a ragged last block (masked edge) ---
    batch2 = 200
    x2 = jax.random.normal(k_x2, (batch2, state_size), jnp.float32)
    out2 = qnetwork_forward(x2, *params)
    jax.block_until_ready(out2)
    assert out2.shape == (batch2, action_size)
    assert jnp.allclose(out2, _reference_bf16(x2, params), atol=1e-2, rtol=1e-2)

    print("KERNEL_OK")
</pallas_src>

<mosaic_0001>
module attributes {stable_mosaic.version = 11 : i64} {
  func.func @_qnetwork_kernel(%arg0: i32, %arg1: memref<2x8xf32, #tpu.memory_space<vmem>>, %arg2: memref<8x64xf32, #tpu.memory_space<vmem>>, %arg3: memref<1x64xf32, #tpu.memory_space<vmem>>, %arg4: memref<64x64xf32, #tpu.memory_space<vmem>>, %arg5: memref<1x64xf32, #tpu.memory_space<vmem>>, %arg6: memref<64x4xf32, #tpu.memory_space<vmem>>, %arg7: memref<1x4xf32, #tpu.memory_space<vmem>>, %arg8: memref<2x4xf32, #tpu.memory_space<vmem>>) attributes {dimension_semantics = [#tpu.dimension_semantics<parallel>], iteration_bounds = array<i64: 1>, scalar_prefetch = 0 : i64, scratch_operands = 0 : i64, tpu.core_type = #tpu.core_type<tc>, window_params = [{transform_indices = @transform_0, window_bounds = array<i64: 2, 8>}, {pipeline_mode = #tpu.pipeline_mode<synchronous>, transform_indices = @transform_1, window_bounds = array<i64: 8, 64>}, {pipeline_mode = #tpu.pipeline_mode<synchronous>, transform_indices = @transform_2, window_bounds = array<i64: 1, 64>}, {pipeline_mode = #tpu.pipeline_mode<synchronous>, transform_indices = @transform_3, window_bounds = array<i64: 64, 64>}, {pipeline_mode = #tpu.pipeline_mode<synchronous>, transform_indices = @transform_4, window_bounds = array<i64: 1, 64>}, {pipeline_mode = #tpu.pipeline_mode<synchronous>, transform_indices = @transform_5, window_bounds = array<i64: 64, 4>}, {pipeline_mode = #tpu.pipeline_mode<synchronous>, transform_indices = @transform_6, window_bounds = array<i64: 1, 4>}, {transform_indices = @transform_7, window_bounds = array<i64: 2, 4>}]} {
    %c0 = arith.constant 0 : index
    %c0_0 = arith.constant 0 : index
    %0 = vector.load %arg1[%c0, %c0_0] : memref<2x8xf32, #tpu.memory_space<vmem>>, vector<2x8xf32>
    %1 = arith.truncf %0 : vector<2x8xf32> to vector<2x8xbf16>
    %c0_1 = arith.constant 0 : index
    %c0_2 = arith.constant 0 : index
    %2 = vector.load %arg2[%c0_1, %c0_2] : memref<8x64xf32, #tpu.memory_space<vmem>>, vector<8x64xf32>
    %3 = arith.truncf %2 : vector<8x64xf32> to vector<8x64xbf16>
    %c0_3 = arith.constant 0 : index
    %c0_4 = arith.constant 0 : index
    %4 = vector.load %arg4[%c0_3, %c0_4] : memref<64x64xf32, #tpu.memory_space<vmem>>, vector<64x64xf32>
    %5 = arith.truncf %4 : vector<64x64xf32> to vector<64x64xbf16>
    %c0_5 = arith.constant 0 : index
    %c0_6 = arith.constant 0 : index
    %6 = vector.load %arg6[%c0_5, %c0_6] : memref<64x4xf32, #tpu.memory_space<vmem>>, vector<64x4xf32>
    %7 = arith.truncf %6 : vector<64x4xf32> to vector<64x4xbf16>
    %cst = arith.constant dense<0.000000e+00> : vector<2x64xf32>
    %8 = tpu.matmul %1, %3, %cst {dimension_numbers = #tpu.dot_dimension_numbers<[1], [0], [0], [1], [0, 0, 1, 1], [], []>} : vector<2x8xbf16>, vector<8x64xbf16>, vector<2x64xf32> -> vector<2x64xf32>
    %c0_7 = arith.constant 0 : index
    %c0_8 = arith.constant 0 : index
    %9 = vector.load %arg3[%c0_7, %c0_8] : memref<1x64xf32, #tpu.memory_space<vmem>>, vector<1x64xf32>
    %10 = vector.broadcast %9 : vector<1x64xf32> to vector<2x64xf32>
    %11 = arith.addf %8, %10 : vector<2x64xf32>
    %cst_9 = arith.constant 0.000000e+00 : f32
    %12 = vector.broadcast %cst_9 : f32 to vector<2x64xf32>
    %13 = arith.maximumf %11, %12 : vector<2x64xf32>
    %14 = arith.truncf %13 : vector<2x64xf32> to vector<2x64xbf16>
    %cst_10 = arith.constant dense<0.000000e+00> : vector<2x64xf32>
    %15 = tpu.matmul %14, %5, %cst_10 {dimension_numbers = #tpu.dot_dimension_numbers<[1], [0], [0], [1], [0, 0, 1, 1], [], []>} : vector<2x64xbf16>, vector<64x64xbf16>, vector<2x64xf32> -> vector<2x64xf32>
    %c0_11 = arith.constant 0 : index
    %c0_12 = arith.constant 0 : index
    %16 = vector.load %arg5[%c0_11, %c0_12] : memref<1x64xf32, #tpu.memory_space<vmem>>, vector<1x64xf32>
    %17 = vector.broadcast %16 : vector<1x64xf32> to vector<2x64xf32>
    %18 = arith.addf %15, %17 : vector<2x64xf32>
    %cst_13 = arith.constant 0.000000e+00 : f32
    %19 = vector.broadcast %cst_13 : f32 to vector<2x64xf32>
    %20 = arith.maximumf %18, %19 : vector<2x64xf32>
    %21 = arith.truncf %20 : vector<2x64xf32> to vector<2x64xbf16>
    %cst_14 = arith.constant dense<0.000000e+00> : vector<2x4xf32>
    %22 = tpu.matmul %21, %7, %cst_14 {dimension_numbers = #tpu.dot_dimension_numbers<[1], [0], [0], [1], [0, 0, 1, 1], [], []>} : vector<2x64xbf16>, vector<64x4xbf16>, vector<2x4xf32> -> vector<2x4xf32>
    %c0_15 = arith.constant 0 : index
    %c0_16 = arith.constant 0 : index
    %23 = vector.load %arg7[%c0_15, %c0_16] : memref<1x4xf32, #tpu.memory_space<vmem>>, vector<1x4xf32>
    %24 = vector.broadcast %23 : vector<1x4xf32> to vector<2x4xf32>
    %25 = arith.addf %22, %24 : vector<2x4xf32>
    %c0_17 = arith.constant 0 : index
    %c0_18 = arith.constant 0 : index
    %26 = vector.load %arg8[%c0_17, %c0_18] : memref<2x4xf32, #tpu.memory_space<vmem>>, vector<2x4xf32>
    tpu.vector_store %arg8[%c0_17, %c0_18], %25 {strides = array<i32>} : memref<2x4xf32, #tpu.memory_space<vmem>>, vector<2x4xf32>,
    return
  }
  func.func @transform_0(%arg0: i32) -> (i32, i32) {
    %c0_i32 = arith.constant 0 : i32
    %c0_i32_0 = arith.constant 0 : i32
    return %arg0, %c0_i32 : i32, i32
  }
  func.func @transform_1(%arg0: i32) -> (i32, i32) {
    %c0_i32 = arith.constant 0 : i32
    %c0_i32_0 = arith.constant 0 : i32
    %c0_i32_1 = arith.constant 0 : i32
    return %c0_i32, %c0_i32_0 : i32, i32
  }
  func.func @transform_2(%arg0: i32) -> (i32, i32) {
    %c0_i32 = arith.constant 0 : i32
    %c0_i32_0 = arith.constant 0 : i32
    %c0_i32_1 = arith.constant 0 : i32
    return %c0_i32, %c0_i32_0 : i32, i32
  }
  func.func @transform_3(%arg0: i32) -> (i32, i32) {
    %c0_i32 = arith.constant 0 : i32
    %c0_i32_0 = arith.constant 0 : i32
    %c0_i32_1 = arith.constant 0 : i32
    return %c0_i32, %c0_i32_0 : i32, i32
  }
  func.func @transform_4(%arg0: i32) -> (i32, i32) {
    %c0_i32 = arith.constant 0 : i32
    %c0_i32_0 = arith.constant 0 : i32
    %c0_i32_1 = arith.constant 0 : i32
    return %c0_i32, %c0_i32_0 : i32, i32
  }
  func.func @transform_5(%arg0: i32) -> (i32, i32) {
    %c0_i32 = arith.constant 0 : i32
    %c0_i32_0 = arith.constant 0 : i32
    %c0_i32_1 = arith.constant 0 : i32
    return %c0_i32, %c0_i32_0 : i32, i32
  }
  func.func @transform_6(%arg0: i32) -> (i32, i32) {
    %c0_i32 = arith.constant 0 : i32
    %c0_i32_0 = arith.constant 0 : i32
    %c0_i32_1 = arith.constant 0 : i32
    return %c0_i32, %c0_i32_0 : i32, i32
  }
  func.func @transform_7(%arg0: i32) -> (i32, i32) {
    %c0_i32 = arith.constant 0 : i32
    %c0_i32_0 = arith.constant 0 : i32
    return %arg0, %c0_i32 : i32, i32
  }
}

</mosaic_0001>

<llo_original>
// kernel: qnetwork_forward.1
$region0: #{qnetwork_forward.1}
  #allocation0 [shape = 'u32[]', space=smem, size = 0x4, offset = 0x4, fixed_abs, tag = 'smem constant byte address 0x4 - core index']
  #allocation1 [shape = 'u32[144,128]{1,0:T(1,128)}', space=vmem, size = 0x12000, scoped, tag = 'internal scratch']
  %s0 = inlined_call_operand.vmem [shape: f32[2,8], index: 0, kind: input, shape index: {}]
  %s1 = inlined_call_operand.vmem [shape: f32[8,64], index: 1, kind: input, shape index: {}]
  %s2 = inlined_call_operand.vmem [shape: f32[1,64], index: 2, kind: input, shape index: {}]
  %s3 = inlined_call_operand.vmem [shape: f32[64,64], index: 3, kind: input, shape index: {}]
  %s4 = inlined_call_operand.vmem [shape: f32[1,64], index: 4, kind: input, shape index: {}]
  %s5 = inlined_call_operand.vmem [shape: f32[64,4], index: 5, kind: input, shape index: {}]
  %s6 = inlined_call_operand.vmem [shape: f32[1,4], index: 6, kind: input, shape index: {}]
  %s7 = inlined_call_operand.hbm [shape: f32[2,4], index: 7, kind: output, shape index: {}]
  %s8 = sld [smem:[#allocation0]]
  $region38: #{qnetwork_forward.1} parent=0
    _
  %s10 = ssub.s32 1, %s8
  %s11 = scalar_select 0, %s10, %s8
  $region1: #{qnetwork_forward.1} parent=0
    #allocation2 [shape = 'u8[1024]{0}', space=vmem, size = 0x400, scoped, tag = 'output window, operand 0, single buffered']
    #allocation3 [shape = 's32[1]{0}', space=sflag, size = 0x4, scoped, tag = 'scoped memory for qnetwork_forward.1']
    %12 = vsyncpa [#allocation3], 0
    // Predicated region
    $region2: #{qnetwork_forward.1} parent=1 // pred_check
      _
    $region3: #{qnetwork_forward.1} parent=1 // pred_check_branch
      %14 = sbr.rel (0) target = $region5
    $region4: #{qnetwork_forward.1} parent=1 // pred_region
      _
    $region5: #{qnetwork_forward.1} parent=1 // pred_fallthru
      _
    // Predicated region
    $region6: #{qnetwork_forward.1} parent=1 // pred_check
      _
    $region7: #{qnetwork_forward.1} parent=1 // pred_check_branch
      %16 = sbr.rel (0) target = $region9
    $region8: #{qnetwork_forward.1} parent=1 // pred_region
      _
    $region9: #{qnetwork_forward.1} parent=1 // pred_fallthru
      _
    // Predicated region
    $region10: #{qnetwork_forward.1} parent=1 // pred_check
      _
    $region11: #{qnetwork_forward.1} parent=1 // pred_check_branch
      %18 = sbr.rel (0) target = $region13
    $region12: #{qnetwork_forward.1} parent=1 // pred_region
      _
    $region13: #{qnetwork_forward.1} parent=1 // pred_fallthru
      _
    // Predicated region
    $region14: #{qnetwork_forward.1} parent=1 // pred_check
      _
    $region15: #{qnetwork_forward.1} parent=1 // pred_check_branch
      %20 = sbr.rel (0) target = $region17
    $region16: #{qnetwork_forward.1} parent=1 // pred_region
      _
    $region17: #{qnetwork_forward.1} parent=1 // pred_fallthru
      _
    // Predicated region
    $region18: #{qnetwork_forward.1} parent=1 // pred_check
      _
    $region19: #{qnetwork_forward.1} parent=1 // pred_check_branch
      %22 = sbr.rel (0) target = $region21
    $region20: #{qnetwork_forward.1} parent=1 // pred_region
      _
    $region21: #{qnetwork_forward.1} parent=1 // pred_fallthru
      _
    // Predicated region
    $region22: #{qnetwork_forward.1} parent=1 // pred_check
      _
    $region23: #{qnetwork_forward.1} parent=1 // pred_check_branch
      %24 = sbr.rel (0) target = $region25
    $region24: #{qnetwork_forward.1} parent=1 // pred_region
      _
    $region25: #{qnetwork_forward.1} parent=1 // pred_fallthru
      _
    // Predicated region
    $region26: #{qnetwork_forward.1} parent=1 // pred_check
      _
    $region27: #{qnetwork_forward.1} parent=1 // pred_check_branch
      %26 = sbr.rel (0) target = $region29
    $region28: #{qnetwork_forward.1} parent=1 // pred_region
      _
    $region29: #{qnetwork_forward.1} parent=1 // pred_fallthru
      _
    %v28 = vld [vmem:[%s0] sm:$0x3]
    %v29 = vpack.c.bf16 %v28, %v28
    %v30 = vld [vmem:[%s1] sm:$0xff]
    %v31 = vpack.c.bf16 %v30, %v30
    %v32 = vld [vmem:[%s3] sm:$0xff]
    %v33 = vld [vmem:[%s3 + $0x8] sm:$0xff]
    %v34 = vld [vmem:[%s3 + $0x10] sm:$0xff]
    %v35 = vld [vmem:[%s3 + $0x18] sm:$0xff]
    %v36 = vld [vmem:[%s3 + $0x20] sm:$0xff]
    %v37 = vld [vmem:[%s3 + $0x28] sm:$0xff]
    %v38 = vld [vmem:[%s3 + $0x30] sm:$0xff]
    %v39 = vld [vmem:[%s3 + $0x38] sm:$0xff]
    %v40 = vpack.c.bf16 %v33, %v32
    %v41 = vpack.c.bf16 %v35, %v34
    %v42 = vpack.c.bf16 %v37, %v36
    %v43 = vpack.c.bf16 %v39, %v38
    %v44 = vld [vmem:[%s5] sm:$0xff]
    %v45 = vld [vmem:[%s5 + $0x8] sm:$0xff]
    %v46 = vld [vmem:[%s5 + $0x10] sm:$0xff]
    %v47 = vld [vmem:[%s5 + $0x18] sm:$0xff]
    %v48 = vld [vmem:[%s5 + $0x20] sm:$0xff]
    %v49 = vld [vmem:[%s5 + $0x28] sm:$0xff]
    %v50 = vld [vmem:[%s5 + $0x30] sm:$0xff]
    %v51 = vld [vmem:[%s5 + $0x38] sm:$0xff]
    %v52 = vpack.c.bf16 %v45, %v44
    %v53 = vpack.c.bf16 %v47, %v46
    %v54 = vpack.c.bf16 %v49, %v48
    %v55 = vpack.c.bf16 %v51, %v50
    %v56 = vld [vmem:[%s2] sm:$0x1]
    %v58 = vlaneseq
    %v59 = vshrl.u32 %v58, 7
    %v60 = vsub.s32 0, %v59
    %v61 = vrot.slane %v56, %v60
    %vm63 = vcmask 64512
    %v65 = vsel %vm63, %v29, 0
    %vm67 = vcmask 1043456
    %v69 = vsel %vm67, %v31, 0
    %71 = vmatprep.subr.bf16.mxu0 0
    %72 = vmatpush1.bf16.msra.mxu0 %v69
    %73 = vmatprep.subr.bf16.mxu0 0
    %74 = vmatpush1.bf16.msra.mxu0 0
    %75 = vmatprep.subr.bf16.mxu0 0
    %76 = vmatpush1.bf16.msra.mxu0 0
    %77 = vmatprep.subr.bf16.mxu0 0
    %78 = vmatpush1.bf16.msra.mxu0 0
    %79 = vmatprep.subr.bf16.mxu0 0
    %80 = vmatpush1.bf16.msra.mxu0 0
    %81 = vmatprep.subr.bf16.mxu0 0
    %82 = vmatpush1.bf16.msra.mxu0 0
    %83 = vmatprep.subr.bf16.mxu0 0
    %84 = vmatpush1.bf16.msra.mxu0 0
    %85 = vmatprep.subr.bf16.mxu0 0
    %86 = vmatpush1.bf16.msra.mxu0 0
    %87 = vmatprep.subr.bf16.mxu0 0
    %88 = vmatpush1.bf16.msra.mxu0 0
    %89 = vmatprep.subr.bf16.mxu0 0
    %90 = vmatpush1.bf16.msra.mxu0 0
    %91 = vmatprep.subr.bf16.mxu0 0
    %92 = vmatpush1.bf16.msra.mxu0 0
    %93 = vmatprep.subr.bf16.mxu0 0
    %94 = vmatpush1.bf16.msra.mxu0 0
    %95 = vmatprep.subr.bf16.mxu0 0
    %96 = vmatpush1.bf16.msra.mxu0 0
    %97 = vmatprep.subr.bf16.mxu0 0
    %98 = vmatpush1.bf16.msra.mxu0 0
    %99 = vmatprep.subr.bf16.mxu0 0
    %100 = vmatpush1.bf16.msra.mxu0 0
    %101 = vmatprep.subr.bf16.mxu0 0
    %102 = vmatpush1.bf16.msra.mxu0 0
    %103 = vmatprep.mubr.bf16.mxu0 0
    %104 = vmatmul.mubr.bf16.gmra.mrb[0].mxu0 %v65
    %v105 = vpop.f32.mrb[0].mxu0
    %v106 = vadd.f32 %v61, %v105
    %v107 = vpop.f32.mrb[0].mxu0
    %v108 = vpop.f32.mrb[0].mxu0
    %v109 = vpop.f32.mrb[0].mxu0
    %110 = vdwg.mxu0
    %v111 = vmax.f32 %v106, 0.0
    %v112 = vpack.c.bf16 %v111, %v111
    %v113 = vld [vmem:[%s4] sm:$0x1]
    %v115 = vlaneseq
    %v116 = vshrl.u32 %v115, 7
    %v117 = vsub.s32 0, %v116
    %v118 = vrot.slane %v113, %v117
    %vm120 = vcmask 523264
    %v122 = vsel %vm120, %v112, 0
    %124 = vmatprep.subr.bf16.mxu0 0
    %125 = vmatpush1.bf16.msra.mxu0 %v40
    %126 = vmatprep.subr.bf16.mxu0 0
    %127 = vmatpush1.bf16.msra.mxu0 %v41
    %128 = vmatprep.subr.bf16.mxu0 0
    %129 = vmatpush1.bf16.msra.mxu0 %v42
    %130 = vmatprep.subr.bf16.mxu0 0
    %131 = vmatpush1.bf16.msra.mxu0 %v43
    %132 = vmatprep.subr.bf16.mxu0 0
    %133 = vmatpush1.bf16.msra.mxu0 0
    %134 = vmatprep.subr.bf16.mxu0 0
    %135 = vmatpush1.bf16.msra.mxu0 0
    %136 = vmatprep.subr.bf16.mxu0 0
    %137 = vmatpush1.bf16.msra.mxu0 0
    %138 = vmatprep.subr.bf16.mxu0 0
    %139 = vmatpush1.bf16.msra.mxu0 0
    %140 = vmatprep.subr.bf16.mxu0 0
    %141 = vmatpush1.bf16.msra.mxu0 0
    %142 = vmatprep.subr.bf16.mxu0 0
    %143 = vmatpush1.bf16.msra.mxu0 0
    %144 = vmatprep.subr.bf16.mxu0 0
    %145 = vmatpush1.bf16.msra.mxu0 0
    %146 = vmatprep.subr.bf16.mxu0 0
    %147 = vmatpush1.bf16.msra.mxu0 0
    %148 = vmatprep.subr.bf16.mxu0 0
    %149 = vmatpush1.bf16.msra.mxu0 0
    %150 = vmatprep.subr.bf16.mxu0 0
    %151 = vmatpush1.bf16.msra.mxu0 0
    %152 = vmatprep.subr.bf16.mxu0 0
    %153 = vmatpush1.bf16.msra.mxu0 0
    %154 = vmatprep.subr.bf16.mxu0 0
    %155 = vmatpush1.bf16.msra.mxu0 0
    %156 = vmatprep.mubr.bf16.mxu0 0
    %157 = vmatmul.mubr.bf16.gmra.mrb[0].mxu0 %v122
    %v158 = vpop.f32.mrb[0].mxu0
    %v159 = vadd.f32 %v118, %v158
    %v160 = vpop.f32.mrb[0].mxu0
    %v161 = vpop.f32.mrb[0].mxu0
    %v162 = vpop.f32.mrb[0].mxu0
    %163 = vdwg.mxu0
    %v164 = vmax.f32 %v159, 0.0
    %v165 = vpack.c.bf16 %v164, %v164
    %v166 = vld [vmem:[%s6] sm:$0x1]
    %v168 = vlaneseq
    %v169 = vshrl.u32 %v168, 7
    %v170 = vsub.s32 0, %v169
    %v171 = vrot.slane %v166, %v170
    %v174 = vsel %vm120, %v165, 0
    %176 = vmatprep.subr.bf16.mxu0 0
    %177 = vmatpush1.bf16.msra.mxu0 %v52
    %178 = vmatprep.subr.bf16.mxu0 0
    %179 = vmatpush1.bf16.msra.mxu0 %v53
    %180 = vmatprep.subr.bf16.mxu0 0
    %181 = vmatpush1.bf16.msra.mxu0 %v54
    %182 = vmatprep.subr.bf16.mxu0 0
    %183 = vmatpush1.bf16.msra.mxu0 %v55
    %184 = vmatprep.subr.bf16.mxu0 0
    %185 = vmatpush1.bf16.msra.mxu0 0
    %186 = vmatprep.subr.bf16.mxu0 0
    %187 = vmatpush1.bf16.msra.mxu0 0
    %188 = vmatprep.subr.bf16.mxu0 0
    %189 = vmatpush1.bf16.msra.mxu0 0
    %190 = vmatprep.subr.bf16.mxu0 0
    %191 = vmatpush1.bf16.msra.mxu0 0
    %192 = vmatprep.subr.bf16.mxu0 0
    %193 = vmatpush1.bf16.msra.mxu0 0
    %194 = vmatprep.subr.bf16.mxu0 0
    %195 = vmatpush1.bf16.msra.mxu0 0
    %196 = vmatprep.subr.bf16.mxu0 0
    %197 = vmatpush1.bf16.msra.mxu0 0
    %198 = vmatprep.subr.bf16.mxu0 0
    %199 = vmatpush1.bf16.msra.mxu0 0
    %200 = vmatprep.subr.bf16.mxu0 0
    %201 = vmatpush1.bf16.msra.mxu0 0
    %202 = vmatprep.subr.bf16.mxu0 0
    %203 = vmatpush1.bf16.msra.mxu0 0
    %204 = vmatprep.subr.bf16.mxu0 0
    %205 = vmatpush1.bf16.msra.mxu0 0
    %206 = vmatprep.subr.bf16.mxu0 0
    %207 = vmatpush1.bf16.msra.mxu0 0
    %208 = vmatprep.mubr.bf16.mxu0 0
    %209 = vmatmul.mubr.bf16.gmra.mrb[0].mxu0 %v174
    %v210 = vpop.f32.mrb[0].mxu0
    %v211 = vadd.f32 %v171, %v210
    %v212 = vpop.f32.mrb[0].mxu0
    %v213 = vpop.f32.mrb[0].mxu0
    %v214 = vpop.f32.mrb[0].mxu0
    %215 = vdwg.mxu0
    %vm216 = vcmask 25600
    %217 = vst.msk [vmem:[#allocation2] sm:$0x3] %vm216, %v211
    // Predicated region
    $region30: #{qnetwork_forward.1} parent=1 // pred_check
      _
    $region31: #{qnetwork_forward.1} parent=1 // pred_check_branch
      %219 = sbr.rel (0) target = $region33
    $region32: #{qnetwork_forward.1} parent=1 // pred_region
      %s221 = ssub.s32 32, 32
      %222 = vsyncadd [#allocation3], %s221
      %s224 = sshll.u32 [#allocation2], 4
      %s225 = int_to_ptr.vmem [resolvable:$true] %s224
      %227 = dma.vmem_to_hbm [thread:$0]  %s225, 32, %s7, [#allocation3]
    $region33: #{qnetwork_forward.1} parent=1 // pred_fallthru
      _
    // Predicated region
    $region34: #{qnetwork_forward.1} parent=1 // pred_check
      _
    $region35: #{qnetwork_forward.1} parent=1 // pred_check_branch
      %229 = sbr.rel (0) target = $region37
    $region36: #{qnetwork_forward.1} parent=1 // pred_region
      %230 = dma.done [#allocation3], 32
    $region37: #{qnetwork_forward.1} parent=1 // pred_fallthru
      _
    %231 = vsyncpa [#allocation3], 1

</llo_original>
